<compile_context>
chip_gen: v6e
topology: v6e:2x2x1
jax: 0.10.0
libtpu: 0.0.40
codegen_flags: <defaults>
</compile_context>

<pallas_src>
import numpy as np
import jax
import jax.numpy as jnp
from jax.experimental import pallas as pl
from jax.experimental.pallas import tpu as pltpu


# ---------------------------------------------------------------------------
# Deterministic "parameters" (mirrors the module __init__), baked in at
# compile time as Python float constants.
# ---------------------------------------------------------------------------
_A_NP = np.array([-1, 0.5, 1, 0.5, 2, 2], dtype=np.float32).reshape(3, 2)
_COF_NP = (np.linalg.inv(_A_NP.T @ _A_NP) @ _A_NP.T).astype(np.float32)  # (2, 3)
_C00, _C01, _C02 = (float(v) for v in _COF_NP[0])
_C10, _C11, _C12 = (float(v) for v in _COF_NP[1])

_LANE_CANDIDATES = (1024, 512, 256, 128)   # lane-dense -> unmasked vst


def _round_up(x, m):
    return ((x + m - 1) // m) * m


def _cdiv(a, b):
    return -(-a // b)


def _lse_kernel(f1_ref, f2_ref, f3_ref, v0_ref, acc_ref):
    # Refs are (tile_rows, lane) VMEM tiles. Pure VPU elementwise work;
    # coefficients are compile-time constants (no SMEM traffic). Upcast to
    # f32 in-kernel so bf16 inputs stream at half the HBM bytes.
    f1 = f1_ref[...].astype(jnp.float32)
    f2 = f2_ref[...].astype(jnp.float32)
    f3 = f3_ref[...].astype(jnp.float32)
    v0_ref[...] = _C00 * f1 + _C01 * f2 + _C02 * f3   # row 0 of cof -> v0
    acc_ref[...] = _C10 * f1 + _C11 * f2 + _C12 * f3  # row 1 of cof -> acc


def _target_block_bytes():
    """Per-array VMEM block target: 4 MiB on v7x (64 MiB VMEM/TC, ~3.2 TB/s
    HBM so per-step overhead matters more), 2 MiB elsewhere."""
    try:
        info = pltpu.get_tpu_info()
        if info.vmem_capacity_bytes <= 64 * 1024 * 1024:   # v7x
            return 4 * 1024 * 1024
    except Exception:
        pass
    return 2 * 1024 * 1024


def lse_acceleration_solver(f1, f2, f3):
    """Returns (v0, acc), each [B, H, W] float32 (matches the PyTorch forward)."""
    assert f1.shape == f2.shape == f3.shape
    B, H, W = f1.shape
    n = B * H * W

    # Accept f32 / bf16 natively (upcast happens in-kernel); anything else is
    # cast to f32 in the wrapper.
    def prep(x):
        return x if x.dtype in (jnp.float32, jnp.bfloat16) else x.astype(jnp.float32)

    f1, f2, f3 = prep(f1), prep(f2), prep(f3)
    all_f32 = all(x.dtype == jnp.float32 for x in (f1, f2, f3))
    row_align = 8 if all_f32 else 16    # sub-32-bit packs 2 rows per sublane

    # ---- lane-dense slab plan: (rows, lane), lane | n when possible --------
    lane = None
    for cand in _LANE_CANDIDATES:
        if n % cand == 0:
            lane = cand
            break
    if lane is None:                     # ragged total size: pad flat once
        lane = _LANE_CANDIDATES[0]
    rows = _cdiv(n, lane)
    n_slab = rows * lane                 # == n whenever lane divides n

    # ---- row tiling ---------------------------------------------------------
    block_bytes_target = _target_block_bytes()
    max_tile_rows = max(block_bytes_target // (lane * 4), row_align)
    max_tile_rows = (max_tile_rows // row_align) * row_align

    if rows <= max_tile_rows and (rows % row_align != 0 or rows < 2 * row_align):
        # Small / ragged row count: one block spanning the full array
        # (block == full dims is always layout-legal).
        tile_rows = rows
    else:
        # >=2 balanced blocks (pipelining / TC sharding); partial last block
        # instead of over-padding a full extra tile of DMA.
        num_tiles = max(_cdiv(rows, max_tile_rows), 2)
        tile_rows = _round_up(_cdiv(rows, num_tiles), row_align)
    grid_n = _cdiv(rows, tile_rows)

    # ---- scoped VMEM budget: 5 arrays x 2 pipeline buffers x block ----------
    block_bytes_actual = tile_rows * lane * 4            # f32 worst case
    vmem_limit = 10 * block_bytes_actual + 4 * 1024 * 1024
    vmem_limit = int(min(max(vmem_limit, 16 * 1024 * 1024), 56 * 1024 * 1024))

    # ---- cost estimate: memory-bound custom call -----------------------------
    in_bytes = sum(x.dtype.itemsize for x in (f1, f2, f3)) * n_slab
    cost = pl.CostEstimate(flops=10 * n_slab, transcendentals=0,
                           bytes_accessed=in_bytes + 2 * 4 * n_slab)

    def to_slab(x):
        x = x.reshape(-1)
        if n_slab != n:
            x = jnp.pad(x, (0, n_slab - n))   # fallback only; free bitcast otherwise
        return x.reshape(rows, lane)

    spec = pl.BlockSpec((tile_rows, lane), lambda i: (i, 0))
    out_shape = (
        jax.ShapeDtypeStruct((rows, lane), jnp.float32),
        jax.ShapeDtypeStruct((rows, lane), jnp.float32),
    )

    v0s, accs = pl.pallas_call(
        _lse_kernel,
        out_shape=out_shape,
        grid=(grid_n,),
        in_specs=[spec, spec, spec],
        out_specs=(spec, spec),
        compiler_params=pltpu.CompilerParams(
            dimension_semantics=("parallel",),   # independent row tiles
            vmem_limit_bytes=vmem_limit,
        ),
        cost_estimate=cost,
    )(to_slab(f1), to_slab(f2), to_slab(f3))

    def from_slab(x):
        if n_slab != n:
            x = x.reshape(-1)[:n]
        return x.reshape(B, H, W)

    return from_slab(v0s), from_slab(accs)


if __name__ == "__main__":
    key = jax.random.PRNGKey(0)
    k1, k2, k3 = jax.random.split(key, 3)
    B, H, W = 2, 16, 16
    f1 = jax.random.normal(k1, (B, H, W), dtype=jnp.float32)
    f2 = jax.random.normal(k2, (B, H, W), dtype=jnp.float32)
    f3 = jax.random.normal(k3, (B, H, W), dtype=jnp.float32)

    v0, acc = lse_acceleration_solver(f1, f2, f3)
    jax.block_until_ready((v0, acc))

    # Pure-JAX reference: result = cof @ stack(f1,f2,f3) per batch.
    cof = jnp.asarray(_COF_NP)
    b = jnp.stack(
        [f1.reshape(B, -1), f2.reshape(B, -1), f3.reshape(B, -1)], axis=1
    )  # (B, 3, H*W)
    result = jnp.einsum("ij,bjk->bik", cof, b).reshape(B, 2, H, W)
    np.testing.assert_allclose(np.asarray(v0), np.asarray(result[:, 0]),
                               rtol=1e-5, atol=1e-5)
    np.testing.assert_allclose(np.asarray(acc), np.asarray(result[:, 1]),
                               rtol=1e-5, atol=1e-5)

    print("KERNEL_OK")
</pallas_src>

<mosaic_0001>
module attributes {stable_mosaic.version = 11 : i64} {
  func.func @_lse_kernel(%arg0: i32, %arg1: memref<1x512xf32, #tpu.memory_space<vmem>>, %arg2: memref<1x512xf32, #tpu.memory_space<vmem>>, %arg3: memref<1x512xf32, #tpu.memory_space<vmem>>, %arg4: memref<1x512xf32, #tpu.memory_space<vmem>>, %arg5: memref<1x512xf32, #tpu.memory_space<vmem>>) attributes {dimension_semantics = [#tpu.dimension_semantics<parallel>], iteration_bounds = array<i64: 1>, scalar_prefetch = 0 : i64, scratch_operands = 0 : i64, tpu.core_type = #tpu.core_type<tc>, window_params = [{transform_indices = @transform_0, window_bounds = array<i64: 1, 512>}, {transform_indices = @transform_1, window_bounds = array<i64: 1, 512>}, {transform_indices = @transform_2, window_bounds = array<i64: 1, 512>}, {transform_indices = @transform_3, window_bounds = array<i64: 1, 512>}, {transform_indices = @transform_4, window_bounds = array<i64: 1, 512>}]} {
    %c0 = arith.constant 0 : index
    %c0_0 = arith.constant 0 : index
    %0 = vector.load %arg1[%c0, %c0_0] : memref<1x512xf32, #tpu.memory_space<vmem>>, vector<1x512xf32>
    %c0_1 = arith.constant 0 : index
    %c0_2 = arith.constant 0 : index
    %1 = vector.load %arg2[%c0_1, %c0_2] : memref<1x512xf32, #tpu.memory_space<vmem>>, vector<1x512xf32>
    %c0_3 = arith.constant 0 : index
    %c0_4 = arith.constant 0 : index
    %2 = vector.load %arg3[%c0_3, %c0_4] : memref<1x512xf32, #tpu.memory_space<vmem>>, vector<1x512xf32>
    %cst = arith.constant -0.590909123 : f32
    %3 = vector.broadcast %cst : f32 to vector<1x512xf32>
    %4 = arith.mulf %3, %0 : vector<1x512xf32>
    %cst_5 = arith.constant 0.227272719 : f32
    %5 = vector.broadcast %cst_5 : f32 to vector<1x512xf32>
    %6 = arith.mulf %5, %1 : vector<1x512xf32>
    %7 = arith.addf %4, %6 : vector<1x512xf32>
    %cst_6 = arith.constant 0.0909090638 : f32
    %8 = vector.broadcast %cst_6 : f32 to vector<1x512xf32>
    %9 = arith.mulf %8, %2 : vector<1x512xf32>
    %10 = arith.addf %7, %9 : vector<1x512xf32>
    %c0_7 = arith.constant 0 : index
    %c0_8 = arith.constant 0 : index
    %11 = vector.load %arg4[%c0_7, %c0_8] : memref<1x512xf32, #tpu.memory_space<vmem>>, vector<1x512xf32>
    tpu.vector_store %arg4[%c0_7, %c0_8], %10 {strides = array<i32>} : memref<1x512xf32, #tpu.memory_space<vmem>>, vector<1x512xf32>,
    %cst_9 = arith.constant 0.636363626 : f32
    %12 = vector.broadcast %cst_9 : f32 to vector<1x512xf32>
    %13 = arith.mulf %12, %0 : vector<1x512xf32>
    %cst_10 = arith.constant -0.0909090936 : f32
    %14 = vector.broadcast %cst_10 : f32 to vector<1x512xf32>
    %15 = arith.mulf %14, %1 : vector<1x512xf32>
    %16 = arith.addf %13, %15 : vector<1x512xf32>
    %cst_11 = arith.constant 0.363636374 : f32
    %17 = vector.broadcast %cst_11 : f32 to vector<1x512xf32>
    %18 = arith.mulf %17, %2 : vector<1x512xf32>
    %19 = arith.addf %16, %18 : vector<1x512xf32>
    %c0_12 = arith.constant 0 : index
    %c0_13 = arith.constant 0 : index
    %20 = vector.load %arg5[%c0_12, %c0_13] : memref<1x512xf32, #tpu.memory_space<vmem>>, vector<1x512xf32>
    tpu.vector_store %arg5[%c0_12, %c0_13], %19 {strides = array<i32>} : memref<1x512xf32, #tpu.memory_space<vmem>>, vector<1x512xf32>,
    return
  }
  func.func @transform_0(%arg0: i32) -> (i32, i32) {
    %c0_i32 = arith.constant 0 : i32
    %c0_i32_0 = arith.constant 0 : i32
    return %arg0, %c0_i32 : i32, i32
  }
  func.func @transform_1(%arg0: i32) -> (i32, i32) {
    %c0_i32 = arith.constant 0 : i32
    %c0_i32_0 = arith.constant 0 : i32
    return %arg0, %c0_i32 : i32, i32
  }
  func.func @transform_2(%arg0: i32) -> (i32, i32) {
    %c0_i32 = arith.constant 0 : i32
    %c0_i32_0 = arith.constant 0 : i32
    return %arg0, %c0_i32 : i32, i32
  }
  func.func @transform_3(%arg0: i32) -> (i32, i32) {
    %c0_i32 = arith.constant 0 : i32
    %c0_i32_0 = arith.constant 0 : i32
    return %arg0, %c0_i32 : i32, i32
  }
  func.func @transform_4(%arg0: i32) -> (i32, i32) {
    %c0_i32 = arith.constant 0 : i32
    %c0_i32_0 = arith.constant 0 : i32
    return %arg0, %c0_i32 : i32, i32
  }
}

</mosaic_0001>

<llo_original>
// kernel: tpu_custom_call.1
$region0: #{tpu_custom_call.1}
  #allocation0 [shape = 'u32[]', space=smem, size = 0x4, offset = 0x4, fixed_abs, tag = 'smem constant byte address 0x4 - core index']
  #allocation1 [shape = 'u32[144,128]{1,0:T(1,128)}', space=vmem, size = 0x12000, scoped, tag = 'internal scratch']
  %s0 = inlined_call_operand.hbm [shape: f32[1,512], index: 0, kind: input, shape index: {}]
  %s1 = inlined_call_operand.hbm [shape: f32[1,512], index: 1, kind: input, shape index: {}]
  %s2 = inlined_call_operand.hbm [shape: f32[1,512], index: 2, kind: input, shape index: {}]
  %s3 = inlined_call_operand.hbm [shape: f32[1,512], index: 3, kind: output, shape index: {0}]
  %s4 = inlined_call_operand.hbm [shape: f32[1,512], index: 4, kind: output, shape index: {1}]
  %5 = xla_tuple %s3, %s4
  %s6 = sld [smem:[#allocation0]]
  $region42: #{tpu_custom_call.1} parent=0
    _
  %s8 = ssub.s32 1, %s6
  %s9 = scalar_select 0, %s8, %s6
  $region1: #{tpu_custom_call.1} parent=0
    #allocation2 [shape = 'u8[2048]{0}', space=vmem, size = 0x800, scoped, tag = 'input window, operand 0, single buffered']
    #allocation3 [shape = 's32[1]{0}', space=sflag, size = 0x4, scoped, tag = 'scoped memory for tpu_custom_call.1']
    #allocation4 [shape = 's32[1]{0}', space=sflag, size = 0x4, scoped, tag = 'scoped memory for tpu_custom_call.1']
    #allocation5 [shape = 'u8[2048]{0}', space=vmem, size = 0x800, scoped, tag = 'input window, operand 1, single buffered']
    #allocation6 [shape = 's32[1]{0}', space=sflag, size = 0x4, scoped, tag = 'scoped memory for tpu_custom_call.1']
    #allocation7 [shape = 'u8[2048]{0}', space=vmem, size = 0x800, scoped, tag = 'input window, operand 2, single buffered']
    #allocation8 [shape = 'u8[2048]{0}', space=vmem, size = 0x800, scoped, tag = 'output window, operand 0, single buffered']
    #allocation9 [shape = 'u8[2048]{0}', space=vmem, size = 0x800, scoped, tag = 'output window, operand 1, single buffered']
    #allocation10 [shape = 's32[1]{0}', space=sflag, size = 0x4, scoped, tag = 'scoped memory for tpu_custom_call.1']
    %10 = vsyncpa [#allocation3], 0
    %11 = vsyncpa [#allocation6], 0
    %12 = vsyncpa [#allocation4], 0
    %13 = vsyncpa [#allocation10], 0
    // Predicated region
    $region2: #{tpu_custom_call.1} parent=1 // pred_check
      _
    $region3: #{tpu_custom_call.1} parent=1 // pred_check_branch
      %15 = sbr.rel (0) target = $region5
    $region4: #{tpu_custom_call.1} parent=1 // pred_region
      %s17 = ssub.s32 64, 64
      %18 = vsyncadd [#allocation3], %s17
      %s20 = sshll.u32 [#allocation2], 4
      %s21 = int_to_ptr.vmem [resolvable:$true] %s20
      %23 = dma.hbm_to_vmem [thread:$0]  %s0, 64, %s21, [#allocation3]
    $region5: #{tpu_custom_call.1} parent=1 // pred_fallthru
      _
    // Predicated region
    $region6: #{tpu_custom_call.1} parent=1 // pred_check
      _
    $region7: #{tpu_custom_call.1} parent=1 // pred_check_branch
      %25 = sbr.rel (0) target = $region9
    $region8: #{tpu_custom_call.1} parent=1 // pred_region
      %s27 = ssub.s32 64, 64
      %28 = vsyncadd [#allocation6], %s27
      %s30 = sshll.u32 [#allocation5], 4
      %s31 = int_to_ptr.vmem [resolvable:$true] %s30
      %33 = dma.hbm_to_vmem [thread:$0]  %s1, 64, %s31, [#allocation6]
    $region9: #{tpu_custom_call.1} parent=1 // pred_fallthru
      _
    // Predicated region
    $region10: #{tpu_custom_call.1} parent=1 // pred_check
      _
    $region11: #{tpu_custom_call.1} parent=1 // pred_check_branch
      %35 = sbr.rel (0) target = $region13
    $region12: #{tpu_custom_call.1} parent=1 // pred_region
      %s37 = ssub.s32 64, 64
      %38 = vsyncadd [#allocation6], %s37
      %s40 = sshll.u32 [#allocation7], 4
      %s41 = int_to_ptr.vmem [resolvable:$true] %s40
      %43 = dma.hbm_to_vmem [thread:$0]  %s2, 64, %s41, [#allocation6]
    $region13: #{tpu_custom_call.1} parent=1 // pred_fallthru
      _
    // Predicated region
    $region14: #{tpu_custom_call.1} parent=1 // pred_check
      _
    $region15: #{tpu_custom_call.1} parent=1 // pred_check_branch
      %45 = sbr.rel (0) target = $region17
    $region16: #{tpu_custom_call.1} parent=1 // pred_region
      %46 = dma.done [#allocation3], 64
    $region17: #{tpu_custom_call.1} parent=1 // pred_fallthru
      _
    // Predicated region
    $region18: #{tpu_custom_call.1} parent=1 // pred_check
      _
    $region19: #{tpu_custom_call.1} parent=1 // pred_check_branch
      %48 = sbr.rel (0) target = $region21
    $region20: #{tpu_custom_call.1} parent=1 // pred_region
      %49 = dma.done [#allocation6], 64
    $region21: #{tpu_custom_call.1} parent=1 // pred_fallthru
      _
    // Predicated region
    $region22: #{tpu_custom_call.1} parent=1 // pred_check
      _
    $region23: #{tpu_custom_call.1} parent=1 // pred_check_branch
      %51 = sbr.rel (0) target = $region25
    $region24: #{tpu_custom_call.1} parent=1 // pred_region
      %52 = dma.done [#allocation6], 64
    $region25: #{tpu_custom_call.1} parent=1 // pred_fallthru
      _
    %v53 = vld [vmem:[#allocation2] sm:$0xf]
    %v54 = vld [vmem:[#allocation5] sm:$0xf]
    %v55 = vld [vmem:[#allocation7] sm:$0xf]
    %v56 = vmul.f32 %v53, -0.5909091
    %v57 = vmul.f32 %v54, 0.22727272
    %v58 = vadd.f32 %v56, %v57
    %v59 = vmul.f32 %v55, 0.090909064
    %v60 = vadd.f32 %v58, %v59
    %v61 = vlaneseq
    %vm62 = vcmp.ge.s32.totalorder %v61, 0
    %vm63 = vcmp.lt.s32.totalorder %v61, 512
    %vm64 = vmand %vm62, %vm63
    %65 = vst.msk [vmem:[#allocation8] sm:$0xf] %vm64, %v60
    %v66 = vmul.f32 %v53, 0.6363636
    %v67 = vmul.f32 %v54, -0.09090909
    %v68 = vadd.f32 %v66, %v67
    %v69 = vmul.f32 %v55, 0.36363637
    %v70 = vadd.f32 %v68, %v69
    %71 = vst.msk [vmem:[#allocation9] sm:$0xf] %vm64, %v70
    // Predicated region
    $region26: #{tpu_custom_call.1} parent=1 // pred_check
      _
    $region27: #{tpu_custom_call.1} parent=1 // pred_check_branch
      %73 = sbr.rel (0) target = $region29
    $region28: #{tpu_custom_call.1} parent=1 // pred_region
      %s75 = ssub.s32 64, 64
      %76 = vsyncadd [#allocation4], %s75
      %s78 = sshll.u32 [#allocation8], 4
      %s79 = int_to_ptr.vmem [resolvable:$true] %s78
      %81 = dma.vmem_to_hbm [thread:$0]  %s79, 64, %s3, [#allocation4]
    $region29: #{tpu_custom_call.1} parent=1 // pred_fallthru
      _
    // Predicated region
    $region30: #{tpu_custom_call.1} parent=1 // pred_check
      _
    $region31: #{tpu_custom_call.1} parent=1 // pred_check_branch
      %83 = sbr.rel (0) target = $region33
    $region32: #{tpu_custom_call.1} parent=1 // pred_region
      %s85 = ssub.s32 64, 64
      %86 = vsyncadd [#allocation10], %s85
      %s88 = sshll.u32 [#allocation9], 4
      %s89 = int_to_ptr.vmem [resolvable:$true] %s88
      %91 = dma.vmem_to_hbm [thread:$0]  %s89, 64, %s4, [#allocation10]
    $region33: #{tpu_custom_call.1} parent=1 // pred_fallthru
      _
    // Predicated region
    $region34: #{tpu_custom_call.1} parent=1 // pred_check
      _
    $region35: #{tpu_custom_call.1} parent=1 // pred_check_branch
      %93 = sbr.rel (0) target = $region37
    $region36: #{tpu_custom_call.1} parent=1 // pred_region
      %94 = dma.done [#allocation4], 64
    $region37: #{tpu_custom_call.1} parent=1 // pred_fallthru
      _
    // Predicated region
    $region38: #{tpu_custom_call.1} parent=1 // pred_check
      _
    $region39: #{tpu_custom_call.1} parent=1 // pred_check_branch
      %96 = sbr.rel (0) target = $region41
    $region40: #{tpu_custom_call.1} parent=1 // pred_region
      %97 = dma.done [#allocation10], 64
    $region41: #{tpu_custom_call.1} parent=1 // pred_fallthru
      _
    %98 = vsyncpa [#allocation3], 1
    %99 = vsyncpa [#allocation6], 1
    %100 = vsyncpa [#allocation4], 1
    %101 = vsyncpa [#allocation10], 1

</llo_original>
